<compile_context>
chip_gen: v5e
topology: v5e:2x2
jax: 0.10.0
libtpu: 0.0.40
codegen_flags: <defaults>
</compile_context>

<pallas_src>
import functools

import jax
import jax.numpy as jnp
from jax.experimental import pallas as pl
from jax.experimental.pallas import tpu as pltpu


def _fc_relu_shared_kernel(x_ref, w_ref, b_ref, o_ref, *, mxu_dtype):
    # w_ref holds W.T, already transposed and cast to the MXU dtype in the
    # wrapper (hoisted out of the per-grid-step body).
    # b_ref row 0 = b1, row 1 = b2 (f32, merged into one resident DMA).
    w = w_ref[...]                      # [F, F]
    b = b_ref[...]                      # [2, F]
    x = x_ref[...]                      # [tm, F]
    if mxu_dtype is not None:
        x = x.astype(mxu_dtype)         # per-tile data -> cast in-kernel (VPU)

    # fc1 + relu1: MXU matmul with f32 accumulation; bias/ReLU stay f32.
    h = jnp.dot(x, w, preferred_element_type=jnp.float32)
    h = jnp.maximum(h + b[0:1, :], 0.0)

    # fc2 (shared weight) + relu2.
    if mxu_dtype is not None:
        h = h.astype(mxu_dtype)
    out = jnp.dot(h, w, preferred_element_type=jnp.float32)
    out = jnp.maximum(out + b[1:2, :], 0.0)

    o_ref[...] = out.astype(o_ref.dtype)
    # TODO(synk): for F < 128 the output stores are masked (lane-sparse); a
    # production fix repacks the output into a 128-lane-dense slab wrapper-side.
    # TODO(synk): for very large F, chunk the tm rows with an unrolled fori_loop
    # (and/or drive the MXU weight-stationary via pltpu.matmul_push_rhs, since
    # both GEMMs share the same RHS) to cap live f32 intermediates.


def _vmem_capacity_bytes():
    try:
        return int(pltpu.get_tpu_info().vmem_capacity_bytes)
    except Exception:
        return 64 << 20                 # safe floor (v7x per-TC VMEM)


def _choose_tm(B, F, x_elt, out_elt, row_budget_bytes):
    if B < 8:
        return B                        # block dim == full array dim (tiling rule ok)
    # per-row VMEM: double-buffered x/out tiles + f32 h/out intermediates
    per_row = 2 * F * (x_elt + out_elt) + 2 * F * 4
    cands = [c for c in (1024, 512, 256, 128, 64, 32, 16, 8) if c <= B]
    fits = [c for c in cands if c * per_row <= row_budget_bytes] or [8]
    for c in fits:                      # prefer >= 4 steps (2 per v7x TensorCore)
        if pl.cdiv(B, c) >= 4:
            return c
    return fits[0]                      # tiny batches: biggest fitting tile


def fc_relu_with_shared(x, w, b1, b2, *, tm=None, mxu_dtype=jnp.bfloat16):
    B, F = x.shape
    assert w.shape == (F, F)

    x_elt = jnp.dtype(x.dtype).itemsize
    out_elt = x_elt

    # One-time (loop-invariant) weight prep, hoisted out of the kernel body:
    # transpose so the kernel uses the standard (1,0) contraction, and cast to
    # the MXU dtype so the resident VMEM block is the final operand.
    w_t = jnp.transpose(w)
    if mxu_dtype is not None:
        w_t = w_t.astype(mxu_dtype)
    w_elt = jnp.dtype(w_t.dtype).itemsize

    # Merge the two biases into one (2, F) slab -> single resident DMA (f32).
    b = jnp.concatenate(
        [jnp.reshape(b1, (1, F)), jnp.reshape(b2, (1, F))], axis=0
    ).astype(jnp.float32)

    # Generation-aware VMEM budget (~75% of physical capacity).
    budget = int(0.75 * _vmem_capacity_bytes())
    resident = 2 * F * F * w_elt + 2 * 2 * F * 4      # conservative: dbl-buffered
    if tm is None:
        tm = _choose_tm(B, F, x_elt, out_elt, budget - resident - (4 << 20))
    grid = (pl.cdiv(B, tm),)

    need = (resident
            + 2 * tm * F * (x_elt + out_elt)          # double-buffered x/out tiles
            + 2 * tm * F * 4                          # f32 h/out intermediates
            + (2 << 20))                              # slack
    vmem_limit = int(min(max(need, 8 << 20), budget))

    cost = pl.CostEstimate(
        flops=4 * B * F * F,                          # two GEMMs
        transcendentals=0,
        bytes_accessed=(B * F * x_elt + F * F * w_elt + 2 * F * 4
                        + B * F * out_elt),
    )

    kernel = functools.partial(_fc_relu_shared_kernel, mxu_dtype=mxu_dtype)

    def build(single_buffer_resident):
        resident_kw = {}
        if single_buffer_resident:
            resident_kw = dict(pipeline_mode=pl.Buffered(1))
        return pl.pallas_call(
            kernel,
            out_shape=jax.ShapeDtypeStruct((B, F), x.dtype),
            grid_spec=pltpu.PrefetchScalarGridSpec(
                num_scalar_prefetch=0,
                grid=grid,
                in_specs=[
                    pl.BlockSpec((tm, F), lambda i: (i, 0)),                 # x tiles
                    pl.BlockSpec((F, F), lambda i: (0, 0), **resident_kw),   # W.T (resident)
                    pl.BlockSpec((2, F), lambda i: (0, 0), **resident_kw),   # biases (resident)
                ],
                out_specs=pl.BlockSpec((tm, F), lambda i: (i, 0)),
            ),
            compiler_params=pltpu.CompilerParams(
                dimension_semantics=("parallel",),    # batch rows are independent
                vmem_limit_bytes=vmem_limit,
            ),
            cost_estimate=cost,
        )

    if hasattr(pl, "Buffered"):
        try:
            return build(True)(x, w_t, b)
        except Exception:
            pass                        # fall back to default double-buffering
    return build(False)(x, w_t, b)


def reference(x, w, b1, b2):
    h = jnp.maximum(x @ w.T + jnp.reshape(b1, (1, -1)), 0.0)
    return jnp.maximum(h @ w.T + jnp.reshape(b2, (1, -1)), 0.0)


if __name__ == "__main__":
    B = 8            # batch
    F = 32           # in_features == out_features

    key = jax.random.PRNGKey(0)
    kx, kw, kb1, kb2 = jax.random.split(key, 4)

    x = jax.random.normal(kx, (B, F), dtype=jnp.float32)
    # Deterministic "checkpoint" parameters (fc1.weight == fc2.weight, shared).
    w = jax.random.normal(kw, (F, F), dtype=jnp.float32) * 0.1
    b1 = jax.random.normal(kb1, (F,), dtype=jnp.float32) * 0.1
    b2 = jax.random.normal(kb2, (F,), dtype=jnp.float32) * 0.1
    # NOTE: the module's `unused_fc1` never participates in forward; omitted.

    ref = reference(x, w, b1, b2)

    # Default fast path: bf16 MXU operands, f32 accumulation (relaxed tolerance
    # vs the f32 PyTorch reference, as documented).
    out_fast = fc_relu_with_shared(x, w, b1, b2)
    jax.block_until_ready(out_fast)
    assert out_fast.shape == (B, F)
    assert jnp.allclose(out_fast, ref, atol=5e-2, rtol=5e-2), "bf16-MXU path mismatch"

    # Exact f32 path (bit-close to the f32 PyTorch module).
    out_exact = fc_relu_with_shared(x, w, b1, b2, mxu_dtype=None)
    jax.block_until_ready(out_exact)
    assert jnp.allclose(out_exact, ref, atol=1e-5, rtol=1e-5), "f32 path mismatch"

    print("KERNEL_OK")
</pallas_src>

<mosaic_0001>
module attributes {stable_mosaic.version = 11 : i64} {
  func.func @_fc_relu_shared_kernel(%arg0: i32, %arg1: memref<8x32xf32, #tpu.memory_space<vmem>>, %arg2: memref<32x32xbf16, #tpu.memory_space<vmem>>, %arg3: memref<2x32xf32, #tpu.memory_space<vmem>>, %arg4: memref<8x32xf32, #tpu.memory_space<vmem>>) attributes {dimension_semantics = [#tpu.dimension_semantics<parallel>], iteration_bounds = array<i64: 1>, scalar_prefetch = 0 : i64, scratch_operands = 0 : i64, tpu.core_type = #tpu.core_type<tc>, window_params = [{transform_indices = @transform_0, window_bounds = array<i64: 8, 32>}, {pipeline_mode = #tpu.pipeline_mode<synchronous>, transform_indices = @transform_1, window_bounds = array<i64: 32, 32>}, {pipeline_mode = #tpu.pipeline_mode<synchronous>, transform_indices = @transform_2, window_bounds = array<i64: 2, 32>}, {transform_indices = @transform_3, window_bounds = array<i64: 8, 32>}]} {
    %c0 = arith.constant 0 : index
    %c0_0 = arith.constant 0 : index
    %0 = vector.load %arg2[%c0, %c0_0] : memref<32x32xbf16, #tpu.memory_space<vmem>>, vector<32x32xbf16>
    %c0_1 = arith.constant 0 : index
    %c0_2 = arith.constant 0 : index
    %1 = vector.load %arg3[%c0_1, %c0_2] : memref<2x32xf32, #tpu.memory_space<vmem>>, vector<2x32xf32>
    %c0_3 = arith.constant 0 : index
    %c0_4 = arith.constant 0 : index
    %2 = vector.load %arg1[%c0_3, %c0_4] : memref<8x32xf32, #tpu.memory_space<vmem>>, vector<8x32xf32>
    %3 = arith.truncf %2 : vector<8x32xf32> to vector<8x32xbf16>
    %cst = arith.constant dense<0.000000e+00> : vector<8x32xf32>
    %4 = tpu.matmul %3, %0, %cst {dimension_numbers = #tpu.dot_dimension_numbers<[1], [0], [0], [1], [0, 0, 1, 1], [], []>} : vector<8x32xbf16>, vector<32x32xbf16>, vector<8x32xf32> -> vector<8x32xf32>
    %5 = vector.extract_strided_slice %1 {offsets = [0, 0], sizes = [1, 32], strides = [1, 1]} : vector<2x32xf32> to vector<1x32xf32>
    %6 = vector.broadcast %5 : vector<1x32xf32> to vector<8x32xf32>
    %7 = arith.addf %4, %6 : vector<8x32xf32>
    %cst_5 = arith.constant 0.000000e+00 : f32
    %8 = vector.broadcast %cst_5 : f32 to vector<8x32xf32>
    %9 = arith.maximumf %7, %8 : vector<8x32xf32>
    %10 = arith.truncf %9 : vector<8x32xf32> to vector<8x32xbf16>
    %cst_6 = arith.constant dense<0.000000e+00> : vector<8x32xf32>
    %11 = tpu.matmul %10, %0, %cst_6 {dimension_numbers = #tpu.dot_dimension_numbers<[1], [0], [0], [1], [0, 0, 1, 1], [], []>} : vector<8x32xbf16>, vector<32x32xbf16>, vector<8x32xf32> -> vector<8x32xf32>
    %12 = vector.extract_strided_slice %1 {offsets = [1, 0], sizes = [1, 32], strides = [1, 1]} : vector<2x32xf32> to vector<1x32xf32>
    %13 = vector.broadcast %12 : vector<1x32xf32> to vector<8x32xf32>
    %14 = arith.addf %11, %13 : vector<8x32xf32>
    %cst_7 = arith.constant 0.000000e+00 : f32
    %15 = vector.broadcast %cst_7 : f32 to vector<8x32xf32>
    %16 = arith.maximumf %14, %15 : vector<8x32xf32>
    %c0_8 = arith.constant 0 : index
    %c0_9 = arith.constant 0 : index
    %17 = vector.load %arg4[%c0_8, %c0_9] : memref<8x32xf32, #tpu.memory_space<vmem>>, vector<8x32xf32>
    tpu.vector_store %arg4[%c0_8, %c0_9], %16 {strides = array<i32>} : memref<8x32xf32, #tpu.memory_space<vmem>>, vector<8x32xf32>,
    return
  }
  func.func @transform_0(%arg0: i32) -> (i32, i32) {
    %c0_i32 = arith.constant 0 : i32
    %c0_i32_0 = arith.constant 0 : i32
    return %arg0, %c0_i32 : i32, i32
  }
  func.func @transform_1(%arg0: i32) -> (i32, i32) {
    %c0_i32 = arith.constant 0 : i32
    %c0_i32_0 = arith.constant 0 : i32
    %c0_i32_1 = arith.constant 0 : i32
    return %c0_i32, %c0_i32_0 : i32, i32
  }
  func.func @transform_2(%arg0: i32) -> (i32, i32) {
    %c0_i32 = arith.constant 0 : i32
    %c0_i32_0 = arith.constant 0 : i32
    %c0_i32_1 = arith.constant 0 : i32
    return %c0_i32, %c0_i32_0 : i32, i32
  }
  func.func @transform_3(%arg0: i32) -> (i32, i32) {
    %c0_i32 = arith.constant 0 : i32
    %c0_i32_0 = arith.constant 0 : i32
    return %arg0, %c0_i32 : i32, i32
  }
}

module attributes {stable_mosaic.version = 11 : i64} {
  func.func @_fc_relu_shared_kernel(%arg0: i32, %arg1: memref<8x32xf32, #tpu.memory_space<vmem>>, %arg2: memref<32x32xbf16, #tpu.memory_space<vmem>>, %arg3: memref<2x32xf32, #tpu.memory_space<vmem>>, %arg4: memref<8x32xf32, #tpu.memory_space<vmem>>) attributes {dimension_semantics = [#tpu.dimension_semantics<parallel>], iteration_bounds = array<i64: 1>, scalar_prefetch = 0 : i64, scratch_operands = 0 : i64, tpu.core_type = #tpu.core_type<tc>, window_params = [{transform_indices = @transform_0, window_bounds = array<i64: 8, 32>}, {pipeline_mode = #tpu.pipeline_mode<synchronous>, transform_indices = @transform_1, window_bounds = array<i64: 32, 32>}, {pipeline_mode = #tpu.pipeline_mode<synchronous>, transform_indices = @transform_2, window_bounds = array<i64: 2, 32>}, {transform_indices = @transform_3, window_bounds = array<i64: 8, 32>}]} {
    %c0 = arith.constant 0 : index
    %c0_0 = arith.constant 0 : index
    %0 = vector.load %arg2[%c0, %c0_0] : memref<32x32xbf16, #tpu.memory_space<vmem>>, vector<32x32xbf16>
    %c0_1 = arith.constant 0 : index
    %c0_2 = arith.constant 0 : index
    %1 = vector.load %arg3[%c0_1, %c0_2] : memref<2x32xf32, #tpu.memory_space<vmem>>, vector<2x32xf32>
    %c0_3 = arith.constant 0 : index
    %c0_4 = arith.constant 0 : index
    %2 = vector.load %arg1[%c0_3, %c0_4] : memref<8x32xf32, #tpu.memory_space<vmem>>, vector<8x32xf32>
    %3 = arith.truncf %2 : vector<8x32xf32> to vector<8x32xbf16>
    %cst = arith.constant dense<0.000000e+00> : vector<8x32xf32>
    %4 = tpu.matmul %3, %0, %cst {dimension_numbers = #tpu.dot_dimension_numbers<[1], [0], [0], [1], [0, 0, 1, 1], [], []>} : vector<8x32xbf16>, vector<32x32xbf16>, vector<8x32xf32> -> vector<8x32xf32>
    %5 = vector.extract_strided_slice %1 {offsets = [0, 0], sizes = [1, 32], strides = [1, 1]} : vector<2x32xf32> to vector<1x32xf32>
    %6 = vector.broadcast %5 : vector<1x32xf32> to vector<8x32xf32>
    %7 = arith.addf %4, %6 : vector<8x32xf32>
    %cst_5 = arith.constant 0.000000e+00 : f32
    %8 = vector.broadcast %cst_5 : f32 to vector<8x32xf32>
    %9 = arith.maximumf %7, %8 : vector<8x32xf32>
    %10 = arith.truncf %9 : vector<8x32xf32> to vector<8x32xbf16>
    %cst_6 = arith.constant dense<0.000000e+00> : vector<8x32xf32>
    %11 = tpu.matmul %10, %0, %cst_6 {dimension_numbers = #tpu.dot_dimension_numbers<[1], [0], [0], [1], [0, 0, 1, 1], [], []>} : vector<8x32xbf16>, vector<32x32xbf16>, vector<8x32xf32> -> vector<8x32xf32>
    %12 = vector.extract_strided_slice %1 {offsets = [1, 0], sizes = [1, 32], strides = [1, 1]} : vector<2x32xf32> to vector<1x32xf32>
    %13 = vector.broadcast %12 : vector<1x32xf32> to vector<8x32xf32>
    %14 = arith.addf %11, %13 : vector<8x32xf32>
    %cst_7 = arith.constant 0.000000e+00 : f32
    %15 = vector.broadcast %cst_7 : f32 to vector<8x32xf32>
    %16 = arith.maximumf %14, %15 : vector<8x32xf32>
    %c0_8 = arith.constant 0 : index
    %c0_9 = arith.constant 0 : index
    %17 = vector.load %arg4[%c0_8, %c0_9] : memref<8x32xf32, #tpu.memory_space<vmem>>, vector<8x32xf32>
    tpu.vector_store %arg4[%c0_8, %c0_9], %16 {strides = array<i32>} : memref<8x32xf32, #tpu.memory_space<vmem>>, vector<8x32xf32>,
    return
  }
  func.func @transform_0(%arg0: i32) -> (i32, i32) {
    %c0_i32 = arith.constant 0 : i32
    %c0_i32_0 = arith.constant 0 : i32
    return %arg0, %c0_i32 : i32, i32
  }
  func.func @transform_1(%arg0: i32) -> (i32, i32) {
    %c0_i32 = arith.constant 0 : i32
    %c0_i32_0 = arith.constant 0 : i32
    %c0_i32_1 = arith.constant 0 : i32
    return %c0_i32, %c0_i32_0 : i32, i32
  }
  func.func @transform_2(%arg0: i32) -> (i32, i32) {
    %c0_i32 = arith.constant 0 : i32
    %c0_i32_0 = arith.constant 0 : i32
    %c0_i32_1 = arith.constant 0 : i32
    return %c0_i32, %c0_i32_0 : i32, i32
  }
  func.func @transform_3(%arg0: i32) -> (i32, i32) {
    %c0_i32 = arith.constant 0 : i32
    %c0_i32_0 = arith.constant 0 : i32
    return %arg0, %c0_i32 : i32, i32
  }
}

</mosaic_0001>

<llo_original>
// kernel: tpu_custom_call.1
$region0: #{tpu_custom_call.1}
  #allocation0 [shape = 'u32[]', space=smem, size = 0x4, offset = 0x4, fixed_abs, tag = 'smem constant byte address 0x4 - core index']
  #allocation1 [shape = 'u32[72,128]{1,0:T(1,128)}', space=vmem, size = 0x9000, scoped, tag = 'internal scratch']
  %s0 = inlined_call_operand.hbm [shape: f32[8,32], index: 0, kind: input, shape index: {}]
  %s1 = inlined_call_operand.hbm [shape: bf16[32,32], index: 1, kind: input, shape index: {}]
  %s2 = inlined_call_operand.hbm [shape: f32[2,32], index: 2, kind: input, shape index: {}]
  %s3 = inlined_call_operand.hbm [shape: f32[8,32], index: 3, kind: output, shape index: {}]
  %s4 = sld [smem:[#allocation0]]
  $region34: #{tpu_custom_call.1} parent=0
    _
  %s6 = ssub.s32 1, %s4
  %s7 = scalar_select 0, %s6, %s4
  $region1: #{tpu_custom_call.1} parent=0
    #allocation2 [shape = 'u8[4096]{0}', space=vmem, size = 0x1000, scoped, tag = 'input window, operand 0, single buffered']
    #allocation3 [shape = 's32[1]{0}', space=sflag, size = 0x4, scoped, tag = 'scoped memory for tpu_custom_call.1']
    #allocation4 [shape = 's32[1]{0}', space=sflag, size = 0x4, scoped, tag = 'scoped memory for tpu_custom_call.1']
    #allocation5 [shape = 'u8[8192]{0}', space=vmem, size = 0x2000, scoped, tag = 'input window, operand 1, single buffered']
    #allocation6 [shape = 's32[1]{0}', space=sflag, size = 0x4, scoped, tag = 'scoped memory for tpu_custom_call.1']
    #allocation7 [shape = 'u8[1024]{0}', space=vmem, size = 0x400, scoped, tag = 'input window, operand 2, single buffered']
    #allocation8 [shape = 'u8[4096]{0}', space=vmem, size = 0x1000, scoped, tag = 'output window, operand 0, single buffered']
    %8 = vsyncpa [#allocation3], 0
    %9 = vsyncpa [#allocation6], 0
    %10 = vsyncpa [#allocation4], 0
    // Predicated region
    $region2: #{tpu_custom_call.1} parent=1 // pred_check
      _
    $region3: #{tpu_custom_call.1} parent=1 // pred_check_branch
      %12 = sbr.rel (0) target = $region5
    $region4: #{tpu_custom_call.1} parent=1 // pred_region
      %14 = vsyncadd [#allocation3], 0
      %s16 = sshll.u32 %s0, 4
      %s17 = int_to_ptr.hbm [resolvable:$true] %s16
      %s18 = sshll.u32 [#allocation2], 4
      %s19 = int_to_ptr.vmem [resolvable:$true] %s18
      %21 = dma.hbm_to_vmem [thread:$0]  %s17, 128, %s19, [#allocation3]
    $region5: #{tpu_custom_call.1} parent=1 // pred_fallthru
      _
    // Predicated region
    $region6: #{tpu_custom_call.1} parent=1 // pred_check
      _
    $region7: #{tpu_custom_call.1} parent=1 // pred_check_branch
      %23 = sbr.rel (0) target = $region9
    $region8: #{tpu_custom_call.1} parent=1 // pred_region
      %25 = vsyncadd [#allocation6], 0
      %s26 = sshll.u32 %s1, 4
      %s27 = int_to_ptr.hbm [resolvable:$true] %s26
      %s28 = sshll.u32 [#allocation5], 4
      %s29 = int_to_ptr.vmem [resolvable:$true] %s28
      %34 = dma.hbm_to_vmem [thread:$0]  %s27, 256, %s29, [#allocation6], 64, 64, 4
    $region9: #{tpu_custom_call.1} parent=1 // pred_fallthru
      _
    // Predicated region
    $region10: #{tpu_custom_call.1} parent=1 // pred_check
      _
    $region11: #{tpu_custom_call.1} parent=1 // pred_check_branch
      %36 = sbr.rel (0) target = $region13
    $region12: #{tpu_custom_call.1} parent=1 // pred_region
      %38 = vsyncadd [#allocation6], 0
      %s40 = sshll.u32 %s2, 4
      %s41 = int_to_ptr.hbm [resolvable:$true] %s40
      %s42 = sshll.u32 [#allocation7], 4
      %s43 = int_to_ptr.vmem [resolvable:$true] %s42
      %45 = dma.hbm_to_vmem [thread:$0]  %s41, 32, %s43, [#allocation6]
    $region13: #{tpu_custom_call.1} parent=1 // pred_fallthru
      _
    // Predicated region
    $region14: #{tpu_custom_call.1} parent=1 // pred_check
      _
    $region15: #{tpu_custom_call.1} parent=1 // pred_check_branch
      %47 = sbr.rel (0) target = $region17
    $region16: #{tpu_custom_call.1} parent=1 // pred_region
      %49 = dma.done [#allocation3], 128
    $region17: #{tpu_custom_call.1} parent=1 // pred_fallthru
      _
    // Predicated region
    $region18: #{tpu_custom_call.1} parent=1 // pred_check
      _
    $region19: #{tpu_custom_call.1} parent=1 // pred_check_branch
      %51 = sbr.rel (0) target = $region21
    $region20: #{tpu_custom_call.1} parent=1 // pred_region
      %53 = dma.done [#allocation6], 256
    $region21: #{tpu_custom_call.1} parent=1 // pred_fallthru
      _
    // Predicated region
    $region22: #{tpu_custom_call.1} parent=1 // pred_check
      _
    $region23: #{tpu_custom_call.1} parent=1 // pred_check_branch
      %55 = sbr.rel (0) target = $region25
    $region24: #{tpu_custom_call.1} parent=1 // pred_region
      %57 = dma.done [#allocation6], 32
    $region25: #{tpu_custom_call.1} parent=1 // pred_fallthru
      _
    %v59 = vld [vmem:[#allocation5] sm:$0xf]
    %v60 = vld [vmem:[#allocation5 + $0x4] sm:$0xf]
    %v61 = vld [vmem:[#allocation5 + $0x8] sm:$0xf]
    %v62 = vld [vmem:[#allocation5 + $0xc] sm:$0xf]
    %v63 = vld [vmem:[#allocation7] sm:$0x3]
    %v64 = vld [vmem:[#allocation2] sm:$0xff]
    %v65 = vpack.c.bf16 %v64, %v64
    %v66 = vperm.slane %v63, 0
    %v71 = vunpack.c.l.b16 %v59
    %v72 = vunpack.c.l.b16 %v60
    %v73 = vunpack.c.l.b16 %v61
    %v74 = vunpack.c.l.b16 %v62
    %v75 = vpack.c.b16 %v72, %v71
    %v76 = vpack.c.b16 %v74, %v73
    %vm79 = vcmask 261120
    %v81 = vsel %vm79, %v65, 0
    %83 = vmatpush.bf16.msra.mxu0 0
    %84 = vmatpush.bf16.msra.mxu0 0
    %85 = vmatpush.bf16.msra.mxu0 0
    %86 = vmatpush.bf16.msra.mxu0 0
    %87 = vmatpush.bf16.msra.mxu0 0
    %88 = vmatpush.bf16.msra.mxu0 0
    %89 = vmatpush.bf16.msra.mxu0 %v76
    %90 = vmatpush.bf16.msra.mxu0 %v75
    %91 = vmatmul.bf16.gmra.mxu0 %v81
    %v92 = vpop.f32.mrf.mxu0
    %v93 = vadd.f32 %v66, %v92
    %v94 = vpop.f32.mrf.mxu0
    %95 = vdwg.mxu0
    %v96 = vmax.f32 %v93, 0.0
    %v97 = vpack.c.bf16 %v96, %v96
    %v98 = vperm.slane %v63, 1
    %v100 = vsel %vm79, %v97, 0
    %102 = vmatpush.bf16.msra.mxu0 0
    %103 = vmatpush.bf16.msra.mxu0 0
    %104 = vmatpush.bf16.msra.mxu0 0
    %105 = vmatpush.bf16.msra.mxu0 0
    %106 = vmatpush.bf16.msra.mxu0 0
    %107 = vmatpush.bf16.msra.mxu0 0
    %108 = vmatpush.bf16.msra.mxu0 %v76
    %109 = vmatpush.bf16.msra.mxu0 %v75
    %110 = vmatmul.bf16.gmra.mxu0 %v100
    %v111 = vpop.f32.mrf.mxu0
    %v112 = vadd.f32 %v98, %v111
    %v113 = vpop.f32.mrf.mxu0
    %114 = vdwg.mxu0
    %v115 = vmax.f32 %v112, 0.0
    %116 = vst.msk [vmem:[#allocation8] sm:$0xff] %vm79, %v115
    // Predicated region
    $region26: #{tpu_custom_call.1} parent=1 // pred_check
      _
    $region27: #{tpu_custom_call.1} parent=1 // pred_check_branch
      %118 = sbr.rel (0) target = $region29
    $region28: #{tpu_custom_call.1} parent=1 // pred_region
      %120 = vsyncadd [#allocation4], 0
      %s122 = sshll.u32 [#allocation8], 4
      %s123 = int_to_ptr.vmem [resolvable:$true] %s122
      %s124 = sshll.u32 %s3, 4
      %s125 = int_to_ptr.hbm [resolvable:$true] %s124
      %127 = dma.vmem_to_hbm [thread:$0]  %s123, 128, %s125, [#allocation4]
    $region29: #{tpu_custom_call.1} parent=1 // pred_fallthru
      _
    // Predicated region
    $region30: #{tpu_custom_call.1} parent=1 // pred_check
      _
    $region31: #{tpu_custom_call.1} parent=1 // pred_check_branch
      %129 = sbr.rel (0) target = $region33
    $region32: #{tpu_custom_call.1} parent=1 // pred_region
      %131 = dma.done [#allocation4], 128
    $region33: #{tpu_custom_call.1} parent=1 // pred_fallthru
      _
    %132 = vsyncpa [#allocation3], 1
    %133 = vsyncpa [#allocation6], 1
    %134 = vsyncpa [#allocation4], 1

// kernel: tpu_custom_call.1
$region0: #{tpu_custom_call.1}
  #allocation0 [shape = 'u32[]', space=smem, size = 0x4, offset = 0x4, fixed_abs, tag = 'smem constant byte address 0x4 - core index']
  #allocation1 [shape = 'u32[72,128]{1,0:T(1,128)}', space=vmem, size = 0x9000, scoped, tag = 'internal scratch']
  %s0 = inlined_call_operand.hbm [shape: f32[8,32], index: 0, kind: input, shape index: {}]
  %s1 = inlined_call_operand.hbm [shape: bf16[32,32], index: 1, kind: input, shape index: {}]
  %s2 = inlined_call_operand.hbm [shape: f32[2,32], index: 2, kind: input, shape index: {}]
  %s3 = inlined_call_operand.hbm [shape: f32[8,32], index: 3, kind: output, shape index: {}]
  %s4 = sld [smem:[#allocation0]]
  $region34: #{tpu_custom_call.1} parent=0
    _
  %s6 = ssub.s32 1, %s4
  %s7 = scalar_select 0, %s6, %s4
  $region1: #{tpu_custom_call.1} parent=0
    #allocation2 [shape = 'u8[4096]{0}', space=vmem, size = 0x1000, scoped, tag = 'input window, operand 0, single buffered']
    #allocation3 [shape = 's32[1]{0}', space=sflag, size = 0x4, scoped, tag = 'scoped memory for tpu_custom_call.1']
    #allocation4 [shape = 's32[1]{0}', space=sflag, size = 0x4, scoped, tag = 'scoped memory for tpu_custom_call.1']
    #allocation5 [shape = 'u8[8192]{0}', space=vmem, size = 0x2000, scoped, tag = 'input window, operand 1, single buffered']
    #allocation6 [shape = 's32[1]{0}', space=sflag, size = 0x4, scoped, tag = 'scoped memory for tpu_custom_call.1']
    #allocation7 [shape = 'u8[1024]{0}', space=vmem, size = 0x400, scoped, tag = 'input window, operand 2, single buffered']
    #allocation8 [shape = 'u8[4096]{0}', space=vmem, size = 0x1000, scoped, tag = 'output window, operand 0, single buffered']
    %8 = vsyncpa [#allocation3], 0
    %9 = vsyncpa [#allocation6], 0
    %10 = vsyncpa [#allocation4], 0
    // Predicated region
    $region2: #{tpu_custom_call.1} parent=1 // pred_check
      _
    $region3: #{tpu_custom_call.1} parent=1 // pred_check_branch
      %12 = sbr.rel (0) target = $region5
    $region4: #{tpu_custom_call.1} parent=1 // pred_region
      %14 = vsyncadd [#allocation3], 0
      %s16 = sshll.u32 %s0, 4
      %s17 = int_to_ptr.hbm [resolvable:$true] %s16
      %s18 = sshll.u32 [#allocation2], 4
      %s19 = int_to_ptr.vmem [resolvable:$true] %s18
      %21 = dma.hbm_to_vmem [thread:$0]  %s17, 128, %s19, [#allocation3]
    $region5: #{tpu_custom_call.1} parent=1 // pred_fallthru
      _
    // Predicated region
    $region6: #{tpu_custom_call.1} parent=1 // pred_check
      _
    $region7: #{tpu_custom_call.1} parent=1 // pred_check_branch
      %23 = sbr.rel (0) target = $region9
    $region8: #{tpu_custom_call.1} parent=1 // pred_region
      %25 = vsyncadd [#allocation6], 0
      %s26 = sshll.u32 %s1, 4
      %s27 = int_to_ptr.hbm [resolvable:$true] %s26
      %s28 = sshll.u32 [#allocation5], 4
      %s29 = int_to_ptr.vmem [resolvable:$true] %s28
      %34 = dma.hbm_to_vmem [thread:$0]  %s27, 256, %s29, [#allocation6], 64, 64, 4
    $region9: #{tpu_custom_call.1} parent=1 // pred_fallthru
      _
    // Predicated region
    $region10: #{tpu_custom_call.1} parent=1 // pred_check
      _
    $region11: #{tpu_custom_call.1} parent=1 // pred_check_branch
      %36 = sbr.rel (0) target = $region13
    $region12: #{tpu_custom_call.1} parent=1 // pred_region
      %38 = vsyncadd [#allocation6], 0
      %s40 = sshll.u32 %s2, 4
      %s41 = int_to_ptr.hbm [resolvable:$true] %s40
      %s42 = sshll.u32 [#allocation7], 4
      %s43 = int_to_ptr.vmem [resolvable:$true] %s42
      %45 = dma.hbm_to_vmem [thread:$0]  %s41, 32, %s43, [#allocation6]
    $region13: #{tpu_custom_call.1} parent=1 // pred_fallthru
      _
    // Predicated region
    $region14: #{tpu_custom_call.1} parent=1 // pred_check
      _
    $region15: #{tpu_custom_call.1} parent=1 // pred_check_branch
      %47 = sbr.rel (0) target = $region17
    $region16: #{tpu_custom_call.1} parent=1 // pred_region
      %49 = dma.done [#allocation3], 128
    $region17: #{tpu_custom_call.1} parent=1 // pred_fallthru
      _
    // Predicated region
    $region18: #{tpu_custom_call.1} parent=1 // pred_check
      _
    $region19: #{tpu_custom_call.1} parent=1 // pred_check_branch
      %51 = sbr.rel (0) target = $region21
    $region20: #{tpu_custom_call.1} parent=1 // pred_region
      %53 = dma.done [#allocation6], 256
    $region21: #{tpu_custom_call.1} parent=1 // pred_fallthru
      _
    // Predicated region
    $region22: #{tpu_custom_call.1} parent=1 // pred_check
      _
    $region23: #{tpu_custom_call.1} parent=1 // pred_check_branch
      %55 = sbr.rel (0) target = $region25
    $region24: #{tpu_custom_call.1} parent=1 // pred_region
      %57 = dma.done [#allocation6], 32
    $region25: #{tpu_custom_call.1} parent=1 // pred_fallthru
      _
    %v59 = vld [vmem:[#allocation5] sm:$0xf]
    %v60 = vld [vmem:[#allocation5 + $0x4] sm:$0xf]
    %v61 = vld [vmem:[#allocation5 + $0x8] sm:$0xf]
    %v62 = vld [vmem:[#allocation5 + $0xc] sm:$0xf]
    %v63 = vld [vmem:[#allocation7] sm:$0x3]
    %v64 = vld [vmem:[#allocation2] sm:$0xff]
    %v65 = vpack.c.bf16 %v64, %v64
    %v66 = vperm.slane %v63, 0
    %v71 = vunpack.c.l.b16 %v59
    %v72 = vunpack.c.l.b16 %v60
    %v73 = vunpack.c.l.b16 %v61
    %v74 = vunpack.c.l.b16 %v62
    %v75 = vpack.c.b16 %v72, %v71
    %v76 = vpack.c.b16 %v74, %v73
    %vm79 = vcmask 261120
    %v81 = vsel %vm79, %v65, 0
    %83 = vmatpush.bf16.msra.mxu0 0
    %84 = vmatpush.bf16.msra.mxu0 0
    %85 = vmatpush.bf16.msra.mxu0 0
    %86 = vmatpush.bf16.msra.mxu0 0
    %87 = vmatpush.bf16.msra.mxu0 0
    %88 = vmatpush.bf16.msra.mxu0 0
    %89 = vmatpush.bf16.msra.mxu0 %v76
    %90 = vmatpush.bf16.msra.mxu0 %v75
    %91 = vmatmul.bf16.gmra.mxu0 %v81
    %v92 = vpop.f32.mrf.mxu0
    %v93 = vadd.f32 %v66, %v92
    %v94 = vpop.f32.mrf.mxu0
    %95 = vdwg.mxu0
    %v96 = vmax.f32 %v93, 0.0
    %v97 = vpack.c.bf16 %v96, %v96
    %v98 = vperm.slane %v63, 1
    %v100 = vsel %vm79, %v97, 0
    %102 = vmatpush.bf16.msra.mxu0 0
    %103 = vmatpush.bf16.msra.mxu0 0
    %104 = vmatpush.bf16.msra.mxu0 0
    %105 = vmatpush.bf16.msra.mxu0 0
    %106 = vmatpush.bf16.msra.mxu0 0
    %107 = vmatpush.bf16.msra.mxu0 0
    %108 = vmatpush.bf16.msra.mxu0 %v76
    %109 = vmatpush.bf16.msra.mxu0 %v75
    %110 = vmatmul.bf16.gmra.mxu0 %v100
    %v111 = vpop.f32.mrf.mxu0
    %v112 = vadd.f32 %v98, %v111
    %v113 = vpop.f32.mrf.mxu0
    %114 = vdwg.mxu0
    %v115 = vmax.f32 %v112, 0.0
    %116 = vst.msk [vmem:[#allocation8] sm:$0xff] %vm79, %v115
    // Predicated region
    $region26: #{tpu_custom_call.1} parent=1 // pred_check
      _
    $region27: #{tpu_custom_call.1} parent=1 // pred_check_branch
      %118 = sbr.rel (0) target = $region29
    $region28: #{tpu_custom_call.1} parent=1 // pred_region
      %120 = vsyncadd [#allocation4], 0
      %s122 = sshll.u32 [#allocation8], 4
      %s123 = int_to_ptr.vmem [resolvable:$true] %s122
      %s124 = sshll.u32 %s3, 4
      %s125 = int_to_ptr.hbm [resolvable:$true] %s124
      %127 = dma.vmem_to_hbm [thread:$0]  %s123, 128, %s125, [#allocation4]
    $region29: #{tpu_custom_call.1} parent=1 // pred_fallthru
      _
    // Predicated region
    $region30: #{tpu_custom_call.1} parent=1 // pred_check
      _
    $region31: #{tpu_custom_call.1} parent=1 // pred_check_branch
      %129 = sbr.rel (0) target = $region33
    $region32: #{tpu_custom_call.1} parent=1 // pred_region
      %131 = dma.done [#allocation4], 128
    $region33: #{tpu_custom_call.1} parent=1 // pred_fallthru
      _
    %132 = vsyncpa [#allocation3], 1
    %133 = vsyncpa [#allocation6], 1
    %134 = vsyncpa [#allocation4], 1

</llo_original>
